<compile_context>
chip_gen: v7x
topology: tpu7x:2x2x1
jax: 0.10.0
libtpu: 0.0.40
codegen_flags: <defaults>
</compile_context>

<pallas_src>
import math

import jax
import jax.numpy as jnp
from jax.experimental import pallas as pl
from jax.experimental.pallas import tpu as pltpu

# Module "parameters" (deterministic, from __init__)
A = 5.1
EPSILON = 6.0 / 8.0 * A          # unused in forward, kept for module fidelity
ETA = 1.0
EPS1 = 1e-12
C0 = 1.0 / (6.0 * math.pi * ETA * A)

# C0 folded into the coefficients.
K1 = 0.75 * A * C0               # C0 * 3*A/4
K2 = 0.5 * A * A * A * C0        # C0 * A^3/2


def _round_up(n, m):
    return ((n + m - 1) // m) * m


def m_ij_kernel(x_ref, o_ref):
    # x_ref: (6, T) f32 in VMEM; o_ref: (9, T) f32 in VMEM. T = lane tile.
    x = x_ref[...]

    dx = x[0:1, :] - x[3:4, :]
    dy = x[1:2, :] - x[4:5, :]
    dz = x[2:3, :] - x[5:6, :]

    r_sq = dx * dx + dy * dy + dz * dz
    r = jnp.sqrt(r_sq)
    r_p = r + EPS1

    # Single exact divide per lane; everything else is VPU multiplies.
    # inv_r_p**3 differs from the reference's 1/r_p_cub by ~2*eps1^2/r_p^2
    # (relative), i.e. far below f32 precision for r >> eps1.
    inv_r_p = 1.0 / r_p
    inv_r_p3 = inv_r_p * inv_r_p * inv_r_p

    ux = dx * inv_r_p
    uy = dy * inv_r_p
    uz = dz * inv_r_p

    c1 = K1 * inv_r_p                       # C0 * 3*A / (4*r_p)
    c2 = K2 * inv_r_p3                      # C0 * A^3 / (2*r_p^3)

    s_iso = c1 + c2                         # identity-part coefficient
    s_out = c1 - 3.0 * c2                   # outer-product coefficient

    # Off-diagonal products computed once, stored to both symmetric slots.
    mxy = s_out * (ux * uy)
    mxz = s_out * (ux * uz)
    myz = s_out * (uy * uz)

    # Row-major flatten of the symmetric 3x3 block: 9 sublane rows, T lanes.
    o_ref[0:1, :] = s_iso + s_out * (ux * ux)
    o_ref[1:2, :] = mxy
    o_ref[2:3, :] = mxz
    o_ref[3:4, :] = mxy
    o_ref[4:5, :] = s_iso + s_out * (uy * uy)
    o_ref[5:6, :] = myz
    o_ref[6:7, :] = mxz
    o_ref[7:8, :] = myz
    o_ref[8:9, :] = s_iso + s_out * (uz * uz)


def m_ij_lane_major(xt, *, tile=65536):
    """Primary (fast) API. xt: (6, N) f32 lane-major pair coords -> (9, N) f32."""
    xt = jnp.asarray(xt, jnp.float32)
    assert xt.ndim == 2 and xt.shape[0] == 6
    n = xt.shape[1]

    # Pad only to a multiple of 128 lanes. Padded lanes get a unit separation
    # (dx = 1) so they stay well conditioned; they are sliced off afterwards.
    n_pad = _round_up(max(n, 1), 128)
    if n_pad != n:
        pad = jnp.zeros((6, n_pad - n), jnp.float32).at[0, :].set(1.0)
        xt = jnp.concatenate([xt, pad], axis=1)

    # Large lane tiles amortize the ~0.35 us/step pipeline overhead while
    # staying under v5e's 16 MiB scoped-VMEM default with double buffering
    # ((6+9)*tile*4*2 bytes ~= 7.9 MiB at tile=65536).
    lane_tile = min(tile, n_pad)
    # v7x megacore: give the "parallel" grid axis >= 2 steps when possible.
    if n_pad // lane_tile < 2 and n_pad >= 256:
        lane_tile = _round_up(pl.cdiv(n_pad, 2), 128)
    grid = (pl.cdiv(n_pad, lane_tile),)   # ragged last block handled by Pallas

    out = pl.pallas_call(
        m_ij_kernel,
        out_shape=jax.ShapeDtypeStruct((9, n_pad), jnp.float32),
        grid=grid,
        in_specs=[pl.BlockSpec((6, lane_tile), lambda i: (0, i))],
        out_specs=pl.BlockSpec((9, lane_tile), lambda i: (0, i)),
        compiler_params=pltpu.CompilerParams(
            dimension_semantics=("parallel",)),
    )(xt)

    return out if n_pad == n else out[:, :n]


def m_ij_forward_batched(x, *, tile=65536):
    """Compatibility API: x (N, 6) f32 -> (N, 9) f32 (flattened 3x3 RPY blocks).

    Prefer m_ij_lane_major for large N to avoid the layout round trips.
    """
    x = jnp.asarray(x, jnp.float32)
    assert x.ndim == 2 and x.shape[1] == 6
    return m_ij_lane_major(x.T, tile=tile).T


def m_ij_forward(x):
    """Original module API: x (1, 6) -> (1, 9)."""
    assert x.shape == (1, 6)
    return m_ij_forward_batched(x)


def m_ij_reference_batched(x):
    """Plain-JAX reference mirroring the PyTorch forward exactly, vectorized over rows."""
    x = jnp.asarray(x, jnp.float32)
    vec = x[:, 0:3] - x[:, 3:6]                       # (N, 3)
    r_sq = jnp.sum(vec ** 2, axis=1, keepdims=True)   # (N, 1)
    r = jnp.sqrt(r_sq)
    r_p = r + EPS1
    r_p_sq = r_sq + 2.0 * r_p * EPS1 + EPS1 * EPS1
    r_p_cub = r_p_sq * r_p
    u = vec / r_p                                     # (N, 3)
    c1 = 3.0 * A / (4.0 * r_p)                        # (N, 1)
    c2 = (A ** 3) / (2.0 * r_p_cub)                   # (N, 1)
    outer = u[:, :, None] * u[:, None, :]             # (N, 3, 3)
    eye = jnp.eye(3, dtype=jnp.float32)[None]
    m = c1[:, :, None] * (eye + outer) + c2[:, :, None] * (eye - 3.0 * outer)
    return (C0 * m).reshape(-1, 9)


if __name__ == "__main__":
    key = jax.random.PRNGKey(0)
    # Small batch of particle-pair coordinates (N pairs, 6 coords each).
    x = jax.random.normal(key, (8, 6), dtype=jnp.float32)
    ref = m_ij_reference_batched(x)

    # Row-major compat API.
    out = jax.block_until_ready(m_ij_forward_batched(x))
    assert out.shape == (8, 9), out.shape
    assert jnp.allclose(out, ref, rtol=1e-5, atol=1e-6), (out, ref)

    # Preferred lane-major API (no layout round trips): (6, N) -> (9, N).
    out_lm = jax.block_until_ready(m_ij_lane_major(x.T))
    assert out_lm.shape == (9, 8), out_lm.shape
    assert jnp.allclose(out_lm.T, ref, rtol=1e-5, atol=1e-6)

    # Non-multiple-of-128 batch exercises padding + a 2-step (megacore) grid
    # with a ragged last block.
    x2 = jax.random.normal(jax.random.PRNGKey(1), (300, 6), dtype=jnp.float32)
    out2 = jax.block_until_ready(m_ij_forward_batched(x2))
    assert jnp.allclose(out2, m_ij_reference_batched(x2), rtol=1e-5, atol=1e-6)

    # Original single-pair module API still works.
    out1 = jax.block_until_ready(m_ij_forward(x[:1]))
    assert out1.shape == (1, 9)
    assert jnp.allclose(out1, ref[:1], rtol=1e-5, atol=1e-6), (out1, ref[:1])

    print("KERNEL_OK")
</pallas_src>

<mosaic_0001>
module attributes {stable_mosaic.version = 11 : i64} {
  func.func @m_ij_kernel(%arg0: i32, %arg1: memref<6x128xf32, #tpu.memory_space<vmem>>, %arg2: memref<9x128xf32, #tpu.memory_space<vmem>>) attributes {dimension_semantics = [#tpu.dimension_semantics<parallel>], iteration_bounds = array<i64: 1>, scalar_prefetch = 0 : i64, scratch_operands = 0 : i64, tpu.core_type = #tpu.core_type<tc>, window_params = [{transform_indices = @transform_0, window_bounds = array<i64: 6, 128>}, {transform_indices = @transform_1, window_bounds = array<i64: 9, 128>}]} {
    %c0 = arith.constant 0 : index
    %c0_0 = arith.constant 0 : index
    %0 = vector.load %arg1[%c0, %c0_0] : memref<6x128xf32, #tpu.memory_space<vmem>>, vector<6x128xf32>
    %1 = vector.extract_strided_slice %0 {offsets = [0, 0], sizes = [1, 128], strides = [1, 1]} : vector<6x128xf32> to vector<1x128xf32>
    %2 = vector.extract_strided_slice %0 {offsets = [3, 0], sizes = [1, 128], strides = [1, 1]} : vector<6x128xf32> to vector<1x128xf32>
    %3 = arith.subf %1, %2 : vector<1x128xf32>
    %4 = vector.extract_strided_slice %0 {offsets = [1, 0], sizes = [1, 128], strides = [1, 1]} : vector<6x128xf32> to vector<1x128xf32>
    %5 = vector.extract_strided_slice %0 {offsets = [4, 0], sizes = [1, 128], strides = [1, 1]} : vector<6x128xf32> to vector<1x128xf32>
    %6 = arith.subf %4, %5 : vector<1x128xf32>
    %7 = vector.extract_strided_slice %0 {offsets = [2, 0], sizes = [1, 128], strides = [1, 1]} : vector<6x128xf32> to vector<1x128xf32>
    %8 = vector.extract_strided_slice %0 {offsets = [5, 0], sizes = [1, 128], strides = [1, 1]} : vector<6x128xf32> to vector<1x128xf32>
    %9 = arith.subf %7, %8 : vector<1x128xf32>
    %10 = arith.mulf %3, %3 : vector<1x128xf32>
    %11 = arith.mulf %6, %6 : vector<1x128xf32>
    %12 = arith.addf %10, %11 : vector<1x128xf32>
    %13 = arith.mulf %9, %9 : vector<1x128xf32>
    %14 = arith.addf %12, %13 : vector<1x128xf32>
    %15 = math.sqrt %14 : vector<1x128xf32>
    %cst = arith.constant 9.99999996E-13 : f32
    %16 = vector.broadcast %cst : f32 to vector<1x128xf32>
    %17 = arith.addf %15, %16 : vector<1x128xf32>
    %cst_1 = arith.constant 1.000000e+00 : f32
    %18 = vector.broadcast %cst_1 : f32 to vector<1x128xf32>
    %19 = arith.divf %18, %17 : vector<1x128xf32>
    %20 = arith.mulf %19, %19 : vector<1x128xf32>
    %21 = arith.mulf %20, %19 : vector<1x128xf32>
    %22 = arith.mulf %3, %19 : vector<1x128xf32>
    %23 = arith.mulf %6, %19 : vector<1x128xf32>
    %24 = arith.mulf %9, %19 : vector<1x128xf32>
    %cst_2 = arith.constant 0.0397887342 : f32
    %25 = vector.broadcast %cst_2 : f32 to vector<1x128xf32>
    %26 = arith.mulf %25, %19 : vector<1x128xf32>
    %cst_3 = arith.constant 0.689936697 : f32
    %27 = vector.broadcast %cst_3 : f32 to vector<1x128xf32>
    %28 = arith.mulf %27, %21 : vector<1x128xf32>
    %29 = arith.addf %26, %28 : vector<1x128xf32>
    %cst_4 = arith.constant 3.000000e+00 : f32
    %30 = vector.broadcast %cst_4 : f32 to vector<1x128xf32>
    %31 = arith.mulf %30, %28 : vector<1x128xf32>
    %32 = arith.subf %26, %31 : vector<1x128xf32>
    %33 = arith.mulf %22, %23 : vector<1x128xf32>
    %34 = arith.mulf %32, %33 : vector<1x128xf32>
    %35 = arith.mulf %22, %24 : vector<1x128xf32>
    %36 = arith.mulf %32, %35 : vector<1x128xf32>
    %37 = arith.mulf %23, %24 : vector<1x128xf32>
    %38 = arith.mulf %32, %37 : vector<1x128xf32>
    %39 = arith.mulf %22, %22 : vector<1x128xf32>
    %40 = arith.mulf %32, %39 : vector<1x128xf32>
    %41 = arith.addf %29, %40 : vector<1x128xf32>
    %c0_5 = arith.constant 0 : index
    %c0_6 = arith.constant 0 : index
    %42 = vector.load %arg2[%c0_5, %c0_6] : memref<9x128xf32, #tpu.memory_space<vmem>>, vector<1x128xf32>
    tpu.vector_store %arg2[%c0_5, %c0_6], %41 {strides = array<i32>} : memref<9x128xf32, #tpu.memory_space<vmem>>, vector<1x128xf32>,
    %c1 = arith.constant 1 : index
    %c0_7 = arith.constant 0 : index
    %43 = vector.load %arg2[%c1, %c0_7] : memref<9x128xf32, #tpu.memory_space<vmem>>, vector<1x128xf32>
    tpu.vector_store %arg2[%c1, %c0_7], %34 {strides = array<i32>} : memref<9x128xf32, #tpu.memory_space<vmem>>, vector<1x128xf32>,
    %c2 = arith.constant 2 : index
    %c0_8 = arith.constant 0 : index
    %44 = vector.load %arg2[%c2, %c0_8] : memref<9x128xf32, #tpu.memory_space<vmem>>, vector<1x128xf32>
    tpu.vector_store %arg2[%c2, %c0_8], %36 {strides = array<i32>} : memref<9x128xf32, #tpu.memory_space<vmem>>, vector<1x128xf32>,
    %c3 = arith.constant 3 : index
    %c0_9 = arith.constant 0 : index
    %45 = vector.load %arg2[%c3, %c0_9] : memref<9x128xf32, #tpu.memory_space<vmem>>, vector<1x128xf32>
    tpu.vector_store %arg2[%c3, %c0_9], %34 {strides = array<i32>} : memref<9x128xf32, #tpu.memory_space<vmem>>, vector<1x128xf32>,
    %46 = arith.mulf %23, %23 : vector<1x128xf32>
    %47 = arith.mulf %32, %46 : vector<1x128xf32>
    %48 = arith.addf %29, %47 : vector<1x128xf32>
    %c4 = arith.constant 4 : index
    %c0_10 = arith.constant 0 : index
    %49 = vector.load %arg2[%c4, %c0_10] : memref<9x128xf32, #tpu.memory_space<vmem>>, vector<1x128xf32>
    tpu.vector_store %arg2[%c4, %c0_10], %48 {strides = array<i32>} : memref<9x128xf32, #tpu.memory_space<vmem>>, vector<1x128xf32>,
    %c5 = arith.constant 5 : index
    %c0_11 = arith.constant 0 : index
    %50 = vector.load %arg2[%c5, %c0_11] : memref<9x128xf32, #tpu.memory_space<vmem>>, vector<1x128xf32>
    tpu.vector_store %arg2[%c5, %c0_11], %38 {strides = array<i32>} : memref<9x128xf32, #tpu.memory_space<vmem>>, vector<1x128xf32>,
    %c6 = arith.constant 6 : index
    %c0_12 = arith.constant 0 : index
    %51 = vector.load %arg2[%c6, %c0_12] : memref<9x128xf32, #tpu.memory_space<vmem>>, vector<1x128xf32>
    tpu.vector_store %arg2[%c6, %c0_12], %36 {strides = array<i32>} : memref<9x128xf32, #tpu.memory_space<vmem>>, vector<1x128xf32>,
    %c7 = arith.constant 7 : index
    %c0_13 = arith.constant 0 : index
    %52 = vector.load %arg2[%c7, %c0_13] : memref<9x128xf32, #tpu.memory_space<vmem>>, vector<1x128xf32>
    tpu.vector_store %arg2[%c7, %c0_13], %38 {strides = array<i32>} : memref<9x128xf32, #tpu.memory_space<vmem>>, vector<1x128xf32>,
    %53 = arith.mulf %24, %24 : vector<1x128xf32>
    %54 = arith.mulf %32, %53 : vector<1x128xf32>
    %55 = arith.addf %29, %54 : vector<1x128xf32>
    %c8 = arith.constant 8 : index
    %c0_14 = arith.constant 0 : index
    %56 = vector.load %arg2[%c8, %c0_14] : memref<9x128xf32, #tpu.memory_space<vmem>>, vector<1x128xf32>
    tpu.vector_store %arg2[%c8, %c0_14], %55 {strides = array<i32>} : memref<9x128xf32, #tpu.memory_space<vmem>>, vector<1x128xf32>,
    return
  }
  func.func @transform_0(%arg0: i32) -> (i32, i32) {
    %c0_i32 = arith.constant 0 : i32
    %c0_i32_0 = arith.constant 0 : i32
    return %c0_i32, %arg0 : i32, i32
  }
  func.func @transform_1(%arg0: i32) -> (i32, i32) {
    %c0_i32 = arith.constant 0 : i32
    %c0_i32_0 = arith.constant 0 : i32
    return %c0_i32, %arg0 : i32, i32
  }
}

</mosaic_0001>

<llo_original>
// kernel: tpu_custom_call.1
$region0: #{tpu_custom_call.1}
  #allocation0 [shape = 'u32[]', space=smem, size = 0x4, offset = 0x4, fixed_abs, tag = 'smem constant byte address 0x4 - core index']
  #allocation1 [shape = 'u32[144,128]{1,0:T(1,128)}', space=vmem, size = 0x12000, scoped, tag = 'internal scratch']
  %s0 = inlined_call_operand.hbm [shape: f32[6,128], index: 0, kind: input, shape index: {}]
  %s1 = inlined_call_operand.hbm [shape: f32[9,128], index: 1, kind: output, shape index: {}]
  %s2 = sld [smem:[#allocation0]]
  $region18: #{tpu_custom_call.1} parent=0
    _
  %s4 = ssub.s32 1, %s2
  %s5 = scalar_select 0, %s4, %s2
  $region1: #{tpu_custom_call.1} parent=0
    #allocation2 [shape = 'u8[4096]{0}', space=vmem, size = 0x1000, scoped, tag = 'input window, operand 0, single buffered']
    #allocation3 [shape = 's32[1]{0}', space=sflag, size = 0x4, scoped, tag = 'scoped memory for tpu_custom_call.1']
    #allocation4 [shape = 's32[1]{0}', space=sflag, size = 0x4, scoped, tag = 'scoped memory for tpu_custom_call.1']
    #allocation5 [shape = 'u8[8192]{0}', space=vmem, size = 0x2000, scoped, tag = 'output window, operand 0, single buffered']
    %6 = vsyncpa [#allocation3], 0
    %7 = vsyncpa [#allocation4], 0
    // Predicated region
    $region2: #{tpu_custom_call.1} parent=1 // pred_check
      _
    $region3: #{tpu_custom_call.1} parent=1 // pred_check_branch
      %9 = sbr.rel (0) target = $region5
    $region4: #{tpu_custom_call.1} parent=1 // pred_region
      %s11 = ssub.s32 128, 128
      %12 = vsyncadd [#allocation3], %s11
      %s14 = sshll.u32 [#allocation2], 4
      %s15 = int_to_ptr.vmem [resolvable:$true] %s14
      %17 = dma.hbm_to_vmem [thread:$0]  %s0, 128, %s15, [#allocation3]
    $region5: #{tpu_custom_call.1} parent=1 // pred_fallthru
      _
    // Predicated region
    $region6: #{tpu_custom_call.1} parent=1 // pred_check
      _
    $region7: #{tpu_custom_call.1} parent=1 // pred_check_branch
      %19 = sbr.rel (0) target = $region9
    $region8: #{tpu_custom_call.1} parent=1 // pred_region
      %20 = dma.done [#allocation3], 128
    $region9: #{tpu_custom_call.1} parent=1 // pred_fallthru
      _
    %v21 = vld [vmem:[#allocation2] sm:$0x3f]
    %v23 = vrot.slane %v21, 3
    %v25 = vsub.f32 %v21, %v23
    %v26 = vmul.f32 %v25, %v25
    %v28 = vrot.slane %v26, 1
    %v30 = vadd.f32 %v26, %v28
    %v31 = vrot.slane %v26, 2
    %v33 = vadd.f32 %v30, %v31
    %v34 = vrsqrt.pop %v33
    %v35 = vmul.f32 %v33, %v34
    %vm36 = vcmp.eq.f32.partialorder %v33, inf
    %v37 = vsel %vm36, %v33, %v35
    %vm38 = vcmp.eq.f32.partialorder %v33, 0.0
    %v39 = vand.u32 %v33, 2147483648
    %v40 = vsel %vm38, %v39, %v37
    %v41 = vadd.f32 %v40, 1e-12
    %v42 = vrcp.pop %v41
    %v43 = vmul.f32 1.0, %v42
    %v44 = vmul.f32 %v43, %v43
    %v45 = vmul.f32 %v44, %v43
    %v46 = vmul.f32 %v25, %v43
    %v48 = vrot.slane %v43, 7
    %v50 = vmul.f32 %v25, %v48
    %v51 = vrot.slane %v43, 6
    %v53 = vmul.f32 %v25, %v51
    %v54 = vmul.f32 %v43, 0.039788734
    %v55 = vmul.f32 %v45, 0.6899367
    %v56 = vadd.f32 %v54, %v55
    %v57 = vmul.f32 %v55, 3.0
    %v58 = vsub.f32 %v54, %v57
    %v60 = vrot.slane %v50, 1
    %v62 = vmul.f32 %v46, %v60
    %v63 = vmul.f32 %v58, %v62
    %v65 = vrot.slane %v53, 2
    %v67 = vmul.f32 %v46, %v65
    %v68 = vmul.f32 %v58, %v67
    %v69 = vrot.slane %v53, 1
    %v71 = vmul.f32 %v50, %v69
    %v73 = vrot.slane %v71, 1
    %v75 = vmul.f32 %v58, %v73
    %v76 = vmul.f32 %v46, %v46
    %v77 = vmul.f32 %v58, %v76
    %v78 = vadd.f32 %v56, %v77
    %79 = vst [vmem:[#allocation5] sm:$0x1] %v78
    %80 = vst [vmem:[#allocation5 + $0x1] sm:$0x1] %v63
    %81 = vst [vmem:[#allocation5 + $0x2] sm:$0x1] %v68
    %82 = vst [vmem:[#allocation5 + $0x3] sm:$0x1] %v63
    %v83 = vmul.f32 %v50, %v50
    %v85 = vrot.slane %v83, 1
    %v87 = vmul.f32 %v58, %v85
    %v88 = vadd.f32 %v56, %v87
    %89 = vst [vmem:[#allocation5 + $0x4] sm:$0x1] %v88
    %90 = vst [vmem:[#allocation5 + $0x5] sm:$0x1] %v75
    %91 = vst [vmem:[#allocation5 + $0x6] sm:$0x1] %v68
    %92 = vst [vmem:[#allocation5 + $0x7] sm:$0x1] %v75
    %v93 = vmul.f32 %v53, %v53
    %v95 = vrot.slane %v93, 2
    %v97 = vmul.f32 %v58, %v95
    %v98 = vadd.f32 %v56, %v97
    %99 = vst [vmem:[#allocation5 + $0x8] sm:$0x1] %v98
    // Predicated region
    $region10: #{tpu_custom_call.1} parent=1 // pred_check
      _
    $region11: #{tpu_custom_call.1} parent=1 // pred_check_branch
      %101 = sbr.rel (0) target = $region13
    $region12: #{tpu_custom_call.1} parent=1 // pred_region
      %s103 = ssub.s32 256, 256
      %104 = vsyncadd [#allocation4], %s103
      %s105 = sshll.u32 [#allocation5], 4
      %s106 = int_to_ptr.vmem [resolvable:$true] %s105
      %111 = dma.vmem_to_hbm [thread:$0]  %s106, 256, %s1, [#allocation4], 128, 128, 8
    $region13: #{tpu_custom_call.1} parent=1 // pred_fallthru
      _
    // Predicated region
    $region14: #{tpu_custom_call.1} parent=1 // pred_check
      _
    $region15: #{tpu_custom_call.1} parent=1 // pred_check_branch
      %113 = sbr.rel (0) target = $region17
    $region16: #{tpu_custom_call.1} parent=1 // pred_region
      %114 = dma.done [#allocation4], 256
    $region17: #{tpu_custom_call.1} parent=1 // pred_fallthru
      _
    %115 = vsyncpa [#allocation3], 1
    %116 = vsyncpa [#allocation4], 1

</llo_original>
